<compile_context>
chip_gen: v6e
topology: v6e:2x2x1
jax: 0.10.0
libtpu: 0.0.40
codegen_flags: <defaults>
</compile_context>

<pallas_src>
import functools
import math

import jax
import jax.numpy as jnp
from jax.experimental import pallas as pl
from jax.experimental.pallas import tpu as pltpu

_LANE = 128
_SUBLANE = 8


def _round_up(x, m):
    return ((x + m - 1) // m) * m


def _pick_vmem_limit():
    """Per-chip scoped-VMEM limit: ~3/4 of physical VMEM, capped at 100 MiB.
    v5e/v6e (128 MiB) -> 96 MiB, v7x (64 MiB/TC) -> 48 MiB."""
    try:
        cap = int(pltpu.get_tpu_info().vmem_capacity_bytes)
    except Exception:
        cap = 64 * 2**20          # conservative fallback (v7x per-TC size)
    return min((cap * 3) // 4, 100 * 2**20)


def _choose_m_tiling(M, tm_target, min_grid_steps=2):
    """Pick the M tile: as large as tm_target (amortize per-step overhead),
    but capped so that the grid has >= min_grid_steps blocks (so the
    'parallel' axis actually shards across both TensorCores on v7x)."""
    align = 16 if M >= 32 else _SUBLANE        # 16-row alignment packs bf16 sublanes
    tm_target = max(align, (tm_target // align) * align)
    tm_cap = _round_up(pl.cdiv(M, min_grid_steps), align)
    tm = max(align, min(tm_target, tm_cap))
    m_pad = _round_up(M, tm)
    return tm, m_pad


# ---------------------------------------------------------------------------
# Fused FCNet kernel: for each M tile, chain  relu((h @ W_l) + b_l)  across all
# layers while the activation tile stays in VMEM/vregs.  (weight_norm scale is
# pre-folded into W_l.)
# ---------------------------------------------------------------------------
def _fcnet_fused_kernel(x_ref, *refs, num_layers, apply_relu, compute_dtype):
    # refs = (w_0, b_0, w_1, b_1, ..., w_{L-1}, b_{L-1}, o_ref)
    o_ref = refs[-1]
    h = x_ref[...].astype(compute_dtype)          # f32 -> bf16 cast in-kernel
    for l in range(num_layers):
        w_ref = refs[2 * l]
        b_ref = refs[2 * l + 1]
        y = jnp.dot(h, w_ref[...], preferred_element_type=jnp.float32)   # MXU
        y = y + b_ref[...]                        # f32 epilogue
        if apply_relu:
            y = jnp.maximum(y, 0.0)
        if l + 1 < num_layers:
            h = y.astype(compute_dtype)           # bf16 feed into next matmul
        else:
            h = y
    o_ref[...] = h.astype(o_ref.dtype)


# ---------------------------------------------------------------------------
# Parameter init (matches nn.Linear + weight_norm(dim=None) shapes).
# ---------------------------------------------------------------------------
def init_fcnet_params(key, dims):
    params = []
    for i in range(len(dims) - 1):
        in_dim, out_dim = dims[i], dims[i + 1]
        key, kv, kb, kg = jax.random.split(key, 4)
        bound = 1.0 / math.sqrt(in_dim)
        v = jax.random.uniform(kv, (out_dim, in_dim), jnp.float32, -bound, bound)
        b = jax.random.uniform(kb, (out_dim,), jnp.float32, -bound, bound)
        # weight_norm(dim=None) initialises g = ||v||_F (scale == 1); perturb g
        # so the weight_norm scale path is actually exercised in the test.
        g = jnp.linalg.norm(v) * (0.5 + jax.random.uniform(kg, (), jnp.float32))
        params.append({"v": v, "g": g, "b": b})
    return params


def prepare_fcnet(params, compute_dtype=jnp.bfloat16):
    """One-time packing: fold the weight_norm scale g/||V||_F into V (in f32),
    transpose to (K, N), zero-pad every feature dim to a multiple of 128
    (lane-dense) and cast the matmul operands to compute_dtype."""
    dims = [params[0]["v"].shape[1]] + [p["v"].shape[0] for p in params]
    dims_pad = [_round_up(d, _LANE) for d in dims]
    weights, biases = [], []
    for i, p in enumerate(params):
        kin, kout = dims[i], dims[i + 1]
        kin_p, kout_p = dims_pad[i], dims_pad[i + 1]
        scale = p["g"] / jnp.linalg.norm(p["v"])              # scalar, f32
        w_eff = jnp.transpose(scale * p["v"])                 # (K, N), f32
        w = jnp.zeros((kin_p, kout_p), compute_dtype)
        w = w.at[:kin, :kout].set(w_eff.astype(compute_dtype))
        b = jnp.zeros((1, kout_p), jnp.float32).at[0, :kout].set(p["b"])
        weights.append(w)
        biases.append(b)
    return {
        "weights": weights,
        "biases": biases,
        "dims": dims,
        "dims_pad": dims_pad,
        "compute_dtype": compute_dtype,
    }


# ---------------------------------------------------------------------------
# Forward: one fused pallas_call, tiled over M only.
# ---------------------------------------------------------------------------
def fcnet_forward(x, prepared, act="ReLU", tm_target=512, out_dtype=None):
    dims, dims_pad = prepared["dims"], prepared["dims_pad"]
    compute_dtype = prepared["compute_dtype"]
    num_layers = len(prepared["weights"])
    out_dtype = compute_dtype if out_dtype is None else out_dtype

    lead = x.shape[:-1]
    assert x.shape[-1] == dims[0]
    M = math.prod(lead) if lead else 1
    x2d = x.reshape(M, dims[0])                    # keep source dtype (f32):
    # the bf16 cast happens inside the kernel, avoiding an extra HBM pass.

    tm, m_pad = _choose_m_tiling(M, tm_target)
    k0_p, n_last_p = dims_pad[0], dims_pad[-1]

    # Single fused pad (only if needed): no separate cast-then-pad passes.
    if (M != m_pad) or (dims[0] != k0_p):
        x_in = jnp.zeros((m_pad, k0_p), x2d.dtype).at[:M, :dims[0]].set(x2d)
    else:
        x_in = x2d

    grid = (m_pad // tm,)
    operands = []
    for l in range(num_layers):
        operands.append(prepared["weights"][l])
        operands.append(prepared["biases"][l])

    # --- VMEM budget (weights single-buffered via Buffered(1)) -------------
    vmem_limit = _pick_vmem_limit()
    cd = jnp.dtype(compute_dtype).itemsize
    w_bytes = sum(w.size * w.dtype.itemsize for w in prepared["weights"])
    b_bytes = sum(b.size * b.dtype.itemsize for b in prepared["biases"])
    x_bytes = 2 * tm * k0_p * x_in.dtype.itemsize          # double-buffered in
    o_bytes = 2 * tm * n_last_p * jnp.dtype(out_dtype).itemsize  # dbl-buf out
    inter_bytes = 2 * tm * max(dims_pad) * 4                # f32 intermediates
    vmem_est = w_bytes + b_bytes + x_bytes + o_bytes + inter_bytes
    assert vmem_est < int(0.7 * vmem_limit), (
        "FCNet weights too large for the fully fused VMEM-resident kernel")
    # TODO(synk): fall back to a K/N-tiled per-layer matmul kernel (accumulator
    # scratch + pl.when init/finalize) for FCNets whose weights exceed VMEM.

    flops = sum(2 * m_pad * dims_pad[l] * dims_pad[l + 1]
                for l in range(num_layers))
    bytes_accessed = (x_in.size * x_in.dtype.itemsize + w_bytes + b_bytes
                      + m_pad * n_last_p * jnp.dtype(out_dtype).itemsize)

    kernel = functools.partial(
        _fcnet_fused_kernel,
        num_layers=num_layers,
        apply_relu=(act != ""),
        compute_dtype=compute_dtype,
    )

    def _call(single_buffer_weights):
        wkw = {"pipeline_mode": pl.Buffered(1)} if single_buffer_weights else {}
        in_specs = [pl.BlockSpec((tm, k0_p), lambda i: (i, 0))]
        for l in range(num_layers):
            kp, np_ = dims_pad[l], dims_pad[l + 1]
            # Constant block index => fetched once, VMEM-resident for the run.
            in_specs.append(pl.BlockSpec((kp, np_), lambda i: (0, 0), **wkw))
            in_specs.append(pl.BlockSpec((1, np_), lambda i: (0, 0), **wkw))
        out_spec = pl.BlockSpec((tm, n_last_p), lambda i: (i, 0))
        return pl.pallas_call(
            kernel,
            out_shape=jax.ShapeDtypeStruct((m_pad, n_last_p), out_dtype),
            grid=grid,
            in_specs=in_specs,
            out_specs=out_spec,
            compiler_params=pltpu.CompilerParams(
                dimension_semantics=("parallel",),   # megacore-shard M (v7x)
                vmem_limit_bytes=vmem_limit,
            ),
            cost_estimate=pl.CostEstimate(
                flops=flops, transcendentals=0, bytes_accessed=bytes_accessed),
        )(x_in, *operands)

    try:
        out_padded = _call(True)
    except Exception:
        # Robustness fallback if pipeline_mode=Buffered(1) is unsupported in
        # this jax build (default double-buffered weights instead).
        out_padded = _call(False)

    out = out_padded[:M, :dims[-1]]
    return out.reshape(*lead, dims[-1])


# ---------------------------------------------------------------------------
# Reference (pure jnp, same folded-scale bf16-matmul / f32-epilogue recipe).
# ---------------------------------------------------------------------------
def fcnet_reference(x, params, act="ReLU", compute_dtype=jnp.bfloat16,
                    out_dtype=jnp.bfloat16):
    y = x
    for p in params:
        scale = p["g"] / jnp.linalg.norm(p["v"])
        w = jnp.transpose(scale * p["v"]).astype(compute_dtype)   # (in, out)
        y = jnp.dot(y.astype(compute_dtype), w,
                    preferred_element_type=jnp.float32)
        y = y + p["b"]
        if act != "":
            y = jnp.maximum(y, 0.0)
    return y.astype(out_dtype)


if __name__ == "__main__":
    key = jax.random.PRNGKey(0)
    k_x, k_p = jax.random.split(key)

    # Small FCNet: dims = [32, 64, 32], input (batch=2, seq=8, hidden=32)
    dims = [32, 64, 32]
    batch, seq = 2, 8
    x = jax.random.normal(k_x, (batch, seq, dims[0]), jnp.float32)

    params = init_fcnet_params(k_p, dims)
    prepared = prepare_fcnet(params, compute_dtype=jnp.bfloat16)

    out = fcnet_forward(x, prepared)          # bf16 output, tiled over M
    out = jax.block_until_ready(out)

    ref = fcnet_reference(x, params, compute_dtype=jnp.bfloat16,
                          out_dtype=jnp.bfloat16)
    assert out.shape == (batch, seq, dims[-1])
    assert jnp.allclose(out.astype(jnp.float32), ref.astype(jnp.float32),
                        atol=2e-2, rtol=2e-2), "mismatch vs reference"

    print("KERNEL_OK")
</pallas_src>

<mosaic_0001>
module attributes {stable_mosaic.version = 11 : i64} {
  func.func @_fcnet_fused_kernel(%arg0: i32, %arg1: memref<8x128xf32, #tpu.memory_space<vmem>>, %arg2: memref<128x128xbf16, #tpu.memory_space<vmem>>, %arg3: memref<1x128xf32, #tpu.memory_space<vmem>>, %arg4: memref<128x128xbf16, #tpu.memory_space<vmem>>, %arg5: memref<1x128xf32, #tpu.memory_space<vmem>>, %arg6: memref<8x128xbf16, #tpu.memory_space<vmem>>) attributes {dimension_semantics = [#tpu.dimension_semantics<parallel>], iteration_bounds = array<i64: 2>, scalar_prefetch = 0 : i64, scratch_operands = 0 : i64, tpu.core_type = #tpu.core_type<tc>, window_params = [{transform_indices = @transform_0, window_bounds = array<i64: 8, 128>}, {pipeline_mode = #tpu.pipeline_mode<synchronous>, transform_indices = @transform_1, window_bounds = array<i64: 128, 128>}, {pipeline_mode = #tpu.pipeline_mode<synchronous>, transform_indices = @transform_2, window_bounds = array<i64: 1, 128>}, {pipeline_mode = #tpu.pipeline_mode<synchronous>, transform_indices = @transform_3, window_bounds = array<i64: 128, 128>}, {pipeline_mode = #tpu.pipeline_mode<synchronous>, transform_indices = @transform_4, window_bounds = array<i64: 1, 128>}, {transform_indices = @transform_5, window_bounds = array<i64: 8, 128>}]} {
    %c0 = arith.constant 0 : index
    %c0_0 = arith.constant 0 : index
    %0 = vector.load %arg1[%c0, %c0_0] : memref<8x128xf32, #tpu.memory_space<vmem>>, vector<8x128xf32>
    %1 = arith.truncf %0 : vector<8x128xf32> to vector<8x128xbf16>
    %c0_1 = arith.constant 0 : index
    %c0_2 = arith.constant 0 : index
    %2 = vector.load %arg2[%c0_1, %c0_2] : memref<128x128xbf16, #tpu.memory_space<vmem>>, vector<128x128xbf16>
    %cst = arith.constant dense<0.000000e+00> : vector<8x128xf32>
    %3 = tpu.matmul %1, %2, %cst {dimension_numbers = #tpu.dot_dimension_numbers<[1], [0], [0], [1], [0, 0, 1, 1], [], []>} : vector<8x128xbf16>, vector<128x128xbf16>, vector<8x128xf32> -> vector<8x128xf32>
    %c0_3 = arith.constant 0 : index
    %c0_4 = arith.constant 0 : index
    %4 = vector.load %arg3[%c0_3, %c0_4] : memref<1x128xf32, #tpu.memory_space<vmem>>, vector<1x128xf32>
    %5 = vector.broadcast %4 : vector<1x128xf32> to vector<8x128xf32>
    %6 = arith.addf %3, %5 : vector<8x128xf32>
    %cst_5 = arith.constant 0.000000e+00 : f32
    %7 = vector.broadcast %cst_5 : f32 to vector<8x128xf32>
    %8 = arith.maximumf %6, %7 : vector<8x128xf32>
    %9 = arith.truncf %8 : vector<8x128xf32> to vector<8x128xbf16>
    %c0_6 = arith.constant 0 : index
    %c0_7 = arith.constant 0 : index
    %10 = vector.load %arg4[%c0_6, %c0_7] : memref<128x128xbf16, #tpu.memory_space<vmem>>, vector<128x128xbf16>
    %cst_8 = arith.constant dense<0.000000e+00> : vector<8x128xf32>
    %11 = tpu.matmul %9, %10, %cst_8 {dimension_numbers = #tpu.dot_dimension_numbers<[1], [0], [0], [1], [0, 0, 1, 1], [], []>} : vector<8x128xbf16>, vector<128x128xbf16>, vector<8x128xf32> -> vector<8x128xf32>
    %c0_9 = arith.constant 0 : index
    %c0_10 = arith.constant 0 : index
    %12 = vector.load %arg5[%c0_9, %c0_10] : memref<1x128xf32, #tpu.memory_space<vmem>>, vector<1x128xf32>
    %13 = vector.broadcast %12 : vector<1x128xf32> to vector<8x128xf32>
    %14 = arith.addf %11, %13 : vector<8x128xf32>
    %cst_11 = arith.constant 0.000000e+00 : f32
    %15 = vector.broadcast %cst_11 : f32 to vector<8x128xf32>
    %16 = arith.maximumf %14, %15 : vector<8x128xf32>
    %17 = arith.truncf %16 : vector<8x128xf32> to vector<8x128xbf16>
    %c0_12 = arith.constant 0 : index
    %c0_13 = arith.constant 0 : index
    %18 = vector.load %arg6[%c0_12, %c0_13] : memref<8x128xbf16, #tpu.memory_space<vmem>>, vector<8x128xbf16>
    tpu.vector_store %arg6[%c0_12, %c0_13], %17 {strides = array<i32>} : memref<8x128xbf16, #tpu.memory_space<vmem>>, vector<8x128xbf16>,
    return
  }
  func.func @transform_0(%arg0: i32) -> (i32, i32) {
    %c0_i32 = arith.constant 0 : i32
    %c0_i32_0 = arith.constant 0 : i32
    return %arg0, %c0_i32 : i32, i32
  }
  func.func @transform_1(%arg0: i32) -> (i32, i32) {
    %c0_i32 = arith.constant 0 : i32
    %c0_i32_0 = arith.constant 0 : i32
    %c0_i32_1 = arith.constant 0 : i32
    return %c0_i32, %c0_i32_0 : i32, i32
  }
  func.func @transform_2(%arg0: i32) -> (i32, i32) {
    %c0_i32 = arith.constant 0 : i32
    %c0_i32_0 = arith.constant 0 : i32
    %c0_i32_1 = arith.constant 0 : i32
    return %c0_i32, %c0_i32_0 : i32, i32
  }
  func.func @transform_3(%arg0: i32) -> (i32, i32) {
    %c0_i32 = arith.constant 0 : i32
    %c0_i32_0 = arith.constant 0 : i32
    %c0_i32_1 = arith.constant 0 : i32
    return %c0_i32, %c0_i32_0 : i32, i32
  }
  func.func @transform_4(%arg0: i32) -> (i32, i32) {
    %c0_i32 = arith.constant 0 : i32
    %c0_i32_0 = arith.constant 0 : i32
    %c0_i32_1 = arith.constant 0 : i32
    return %c0_i32, %c0_i32_0 : i32, i32
  }
  func.func @transform_5(%arg0: i32) -> (i32, i32) {
    %c0_i32 = arith.constant 0 : i32
    %c0_i32_0 = arith.constant 0 : i32
    return %arg0, %c0_i32 : i32, i32
  }
}

module attributes {stable_mosaic.version = 11 : i64} {
  func.func @_fcnet_fused_kernel(%arg0: i32, %arg1: memref<8x128xf32, #tpu.memory_space<vmem>>, %arg2: memref<128x128xbf16, #tpu.memory_space<vmem>>, %arg3: memref<1x128xf32, #tpu.memory_space<vmem>>, %arg4: memref<128x128xbf16, #tpu.memory_space<vmem>>, %arg5: memref<1x128xf32, #tpu.memory_space<vmem>>, %arg6: memref<8x128xbf16, #tpu.memory_space<vmem>>) attributes {dimension_semantics = [#tpu.dimension_semantics<parallel>], iteration_bounds = array<i64: 2>, scalar_prefetch = 0 : i64, scratch_operands = 0 : i64, tpu.core_type = #tpu.core_type<tc>, window_params = [{transform_indices = @transform_0, window_bounds = array<i64: 8, 128>}, {pipeline_mode = #tpu.pipeline_mode<synchronous>, transform_indices = @transform_1, window_bounds = array<i64: 128, 128>}, {pipeline_mode = #tpu.pipeline_mode<synchronous>, transform_indices = @transform_2, window_bounds = array<i64: 1, 128>}, {pipeline_mode = #tpu.pipeline_mode<synchronous>, transform_indices = @transform_3, window_bounds = array<i64: 128, 128>}, {pipeline_mode = #tpu.pipeline_mode<synchronous>, transform_indices = @transform_4, window_bounds = array<i64: 1, 128>}, {transform_indices = @transform_5, window_bounds = array<i64: 8, 128>}]} {
    %c0 = arith.constant 0 : index
    %c0_0 = arith.constant 0 : index
    %0 = vector.load %arg1[%c0, %c0_0] : memref<8x128xf32, #tpu.memory_space<vmem>>, vector<8x128xf32>
    %1 = arith.truncf %0 : vector<8x128xf32> to vector<8x128xbf16>
    %c0_1 = arith.constant 0 : index
    %c0_2 = arith.constant 0 : index
    %2 = vector.load %arg2[%c0_1, %c0_2] : memref<128x128xbf16, #tpu.memory_space<vmem>>, vector<128x128xbf16>
    %cst = arith.constant dense<0.000000e+00> : vector<8x128xf32>
    %3 = tpu.matmul %1, %2, %cst {dimension_numbers = #tpu.dot_dimension_numbers<[1], [0], [0], [1], [0, 0, 1, 1], [], []>} : vector<8x128xbf16>, vector<128x128xbf16>, vector<8x128xf32> -> vector<8x128xf32>
    %c0_3 = arith.constant 0 : index
    %c0_4 = arith.constant 0 : index
    %4 = vector.load %arg3[%c0_3, %c0_4] : memref<1x128xf32, #tpu.memory_space<vmem>>, vector<1x128xf32>
    %5 = vector.broadcast %4 : vector<1x128xf32> to vector<8x128xf32>
    %6 = arith.addf %3, %5 : vector<8x128xf32>
    %cst_5 = arith.constant 0.000000e+00 : f32
    %7 = vector.broadcast %cst_5 : f32 to vector<8x128xf32>
    %8 = arith.maximumf %6, %7 : vector<8x128xf32>
    %9 = arith.truncf %8 : vector<8x128xf32> to vector<8x128xbf16>
    %c0_6 = arith.constant 0 : index
    %c0_7 = arith.constant 0 : index
    %10 = vector.load %arg4[%c0_6, %c0_7] : memref<128x128xbf16, #tpu.memory_space<vmem>>, vector<128x128xbf16>
    %cst_8 = arith.constant dense<0.000000e+00> : vector<8x128xf32>
    %11 = tpu.matmul %9, %10, %cst_8 {dimension_numbers = #tpu.dot_dimension_numbers<[1], [0], [0], [1], [0, 0, 1, 1], [], []>} : vector<8x128xbf16>, vector<128x128xbf16>, vector<8x128xf32> -> vector<8x128xf32>
    %c0_9 = arith.constant 0 : index
    %c0_10 = arith.constant 0 : index
    %12 = vector.load %arg5[%c0_9, %c0_10] : memref<1x128xf32, #tpu.memory_space<vmem>>, vector<1x128xf32>
    %13 = vector.broadcast %12 : vector<1x128xf32> to vector<8x128xf32>
    %14 = arith.addf %11, %13 : vector<8x128xf32>
    %cst_11 = arith.constant 0.000000e+00 : f32
    %15 = vector.broadcast %cst_11 : f32 to vector<8x128xf32>
    %16 = arith.maximumf %14, %15 : vector<8x128xf32>
    %17 = arith.truncf %16 : vector<8x128xf32> to vector<8x128xbf16>
    %c0_12 = arith.constant 0 : index
    %c0_13 = arith.constant 0 : index
    %18 = vector.load %arg6[%c0_12, %c0_13] : memref<8x128xbf16, #tpu.memory_space<vmem>>, vector<8x128xbf16>
    tpu.vector_store %arg6[%c0_12, %c0_13], %17 {strides = array<i32>} : memref<8x128xbf16, #tpu.memory_space<vmem>>, vector<8x128xbf16>,
    return
  }
  func.func @transform_0(%arg0: i32) -> (i32, i32) {
    %c0_i32 = arith.constant 0 : i32
    %c0_i32_0 = arith.constant 0 : i32
    return %arg0, %c0_i32 : i32, i32
  }
  func.func @transform_1(%arg0: i32) -> (i32, i32) {
    %c0_i32 = arith.constant 0 : i32
    %c0_i32_0 = arith.constant 0 : i32
    %c0_i32_1 = arith.constant 0 : i32
    return %c0_i32, %c0_i32_0 : i32, i32
  }
  func.func @transform_2(%arg0: i32) -> (i32, i32) {
    %c0_i32 = arith.constant 0 : i32
    %c0_i32_0 = arith.constant 0 : i32
    %c0_i32_1 = arith.constant 0 : i32
    return %c0_i32, %c0_i32_0 : i32, i32
  }
  func.func @transform_3(%arg0: i32) -> (i32, i32) {
    %c0_i32 = arith.constant 0 : i32
    %c0_i32_0 = arith.constant 0 : i32
    %c0_i32_1 = arith.constant 0 : i32
    return %c0_i32, %c0_i32_0 : i32, i32
  }
  func.func @transform_4(%arg0: i32) -> (i32, i32) {
    %c0_i32 = arith.constant 0 : i32
    %c0_i32_0 = arith.constant 0 : i32
    %c0_i32_1 = arith.constant 0 : i32
    return %c0_i32, %c0_i32_0 : i32, i32
  }
  func.func @transform_5(%arg0: i32) -> (i32, i32) {
    %c0_i32 = arith.constant 0 : i32
    %c0_i32_0 = arith.constant 0 : i32
    return %arg0, %c0_i32 : i32, i32
  }
}

</mosaic_0001>

<llo_original>
// kernel: tpu_custom_call.1
$region0: #{tpu_custom_call.1}
  #allocation0 [shape = 'u32[]', space=smem, size = 0x4, offset = 0x4, fixed_abs, tag = 'smem constant byte address 0x4 - core index']
  #allocation1 [shape = 'u32[144,128]{1,0:T(1,128)}', space=vmem, size = 0x12000, scoped, tag = 'internal scratch']
  %s0 = inlined_call_operand.hbm [shape: f32[16,128], index: 0, kind: input, shape index: {}]
  %s1 = inlined_call_operand.hbm [shape: bf16[128,128], index: 1, kind: input, shape index: {}]
  %s2 = inlined_call_operand.vmem [shape: f32[1,128], index: 2, kind: input, shape index: {}]
  %s3 = inlined_call_operand.hbm [shape: bf16[128,128], index: 3, kind: input, shape index: {}]
  %s4 = inlined_call_operand.vmem [shape: f32[1,128], index: 4, kind: input, shape index: {}]
  %s5 = inlined_call_operand.hbm [shape: bf16[16,128], index: 5, kind: output, shape index: {}]
  %s6 = sld [smem:[#allocation0]]
  $region65: #{tpu_custom_call.1} parent=0
    _
  %s8 = ssub.s32 1, %s6
  %s9 = scalar_select 0, %s8, %s6
  $region1: #{tpu_custom_call.1} parent=0
    #allocation2 [shape = 'u8[8192]{0}', space=vmem, size = 0x2000, scoped, tag = 'input window, operand 0']
    #allocation3 [shape = 's32[2]{0}', space=sflag, size = 0x8, scoped, tag = 'scoped memory for tpu_custom_call.1']
    #allocation4 [shape = 's32[2]{0}', space=sflag, size = 0x8, scoped, tag = 'scoped memory for tpu_custom_call.1']
    #allocation5 [shape = 'u8[32768]{0}', space=vmem, size = 0x8000, scoped, tag = 'input window, operand 1, single buffered']
    #allocation6 [shape = 's32[1]{0}', space=sflag, size = 0x4, scoped, tag = 'scoped memory for tpu_custom_call.1']
    #allocation7 [shape = 'u8[32768]{0}', space=vmem, size = 0x8000, scoped, tag = 'input window, operand 3, single buffered']
    #allocation8 [shape = 'u8[4096]{0}', space=vmem, size = 0x1000, scoped, tag = 'output window, operand 0']
    %10 = vsyncpa [#allocation3], 0
    %s11 = scalar_lea.sflag [#allocation3], 1
    %12 = vsyncpa %s11, 0
    %13 = vsyncpa [#allocation6], 0
    %14 = vsyncpa [#allocation4], 0
    %s15 = scalar_lea.sflag [#allocation4], 1
    %16 = vsyncpa %s15, 0
    loop: start=0, step=1, limit=4
    $region2: #{tpu_custom_call.1} parent=1 // loop_pre_header
      _
    $region3: #{tpu_custom_call.1} parent=1 // loop_header
      %s18 = sphi 0, %s22
      %p19 = scmp.ge.s32.totalorder %s18, 4
      %s28 = sphi 0, %s30
      %s31 = sphi 0, %s28
      %s32 = sphi 0, %s31
      %s48 = sphi 0, %s32
      %s52 = sphi 0, %s52
      %s54 = sphi 0, %s52
      %s55 = sphi 0, %s54
      %s69 = sphi 0, %s55
      %s73 = sphi 0, %s73
      %s75 = sphi 0, %s73
      %s76 = sphi 0, %s75
      %s90 = sphi 0, %s76
      %s94 = sphi 0, %s94
      %s96 = sphi 0, %s94
      %s97 = sphi 0, %s96
      %s111 = sphi 0, %s97
      %s115 = sphi 0, %s115
      %s117 = sphi 0, %s115
      %s118 = sphi 0, %s117
      %s132 = sphi 0, %s118
      %s138 = sphi 0, %s140
      %s141 = sphi 0, %s138
      %s142 = sphi 0, %s141
      %s158 = sphi 0, %s142
    $region4: #{tpu_custom_call.1} parent=1 // loop_header_branch
      %21 = sbr.rel (%p19) target = $region8
    $region5: #{tpu_custom_call.1} parent=1 // loop_body
      %s23 = ssub.s32 %s18, 1
      %s24 = ssub.s32 %s18, 2
      %s25 = sadd.s32 %s18, 1
      %s26 = ssub.s32 %s18, %s25
      %p27 = scmp.eq.s32.totalorder %s26, 0
      %s29 = sadd.s32 %s28, 1
      %s30 = scalar_select %p27, %s28, %s29
      %p33 = pneg %p27
      %p34 = scmp.eq.s32.totalorder %s18, 1
      %p35 = por %p33, %p34
      %p36 = scmp.ne.s32.totalorder %s28, %s31
      %p37 = scmp.eq.s32.totalorder %s18, 0
      %p38 = por %p36, %p37
      %p39 = scmp.ne.s32.totalorder %s28, %s31
      %p40 = scmp.eq.s32.totalorder %s23, 1
      %p41 = por %p39, %p40
      %p42 = scmp.ne.s32.totalorder %s31, %s32
      %p43 = scmp.eq.s32.totalorder %s23, 0
      %p44 = por %p42, %p43
      %p45 = scmp.ne.s32.totalorder %s31, %s32
      %p46 = scmp.eq.s32.totalorder %s24, 1
      %p47 = por %p45, %p46
      %p49 = scmp.ne.s32.totalorder %s32, %s48
      %p50 = scmp.eq.s32.totalorder %s24, 0
      %p51 = por %p49, %p50
      %s53 = sadd.s32 %s52, 1
      %p56 = scmp.eq.s32.totalorder %s18, 1
      %p57 = scmp.ne.s32.totalorder %s52, %s54
      %p58 = scmp.eq.s32.totalorder %s18, 0
      %p59 = por %p57, %p58
      %p60 = scmp.ne.s32.totalorder %s52, %s54
      %p61 = scmp.eq.s32.totalorder %s23, 1
      %p62 = por %p60, %p61
      %p63 = scmp.ne.s32.totalorder %s54, %s55
      %p64 = scmp.eq.s32.totalorder %s23, 0
      %p65 = por %p63, %p64
      %p66 = scmp.ne.s32.totalorder %s54, %s55
      %p67 = scmp.eq.s32.totalorder %s24, 1
      %p68 = por %p66, %p67
      %p70 = scmp.ne.s32.totalorder %s55, %s69
      %p71 = scmp.eq.s32.totalorder %s24, 0
      %p72 = por %p70, %p71
      %s74 = sadd.s32 %s73, 1
      %p77 = scmp.eq.s32.totalorder %s18, 1
      %p78 = scmp.ne.s32.totalorder %s73, %s75
      %p79 = scmp.eq.s32.totalorder %s18, 0
      %p80 = por %p78, %p79
      %p81 = scmp.ne.s32.totalorder %s73, %s75
      %p82 = scmp.eq.s32.totalorder %s23, 1
      %p83 = por %p81, %p82
      %p84 = scmp.ne.s32.totalorder %s75, %s76
      %p85 = scmp.eq.s32.totalorder %s23, 0
      %p86 = por %p84, %p85
      %p87 = scmp.ne.s32.totalorder %s75, %s76
      %p88 = scmp.eq.s32.totalorder %s24, 1
      %p89 = por %p87, %p88
      %p91 = scmp.ne.s32.totalorder %s76, %s90
      %p92 = scmp.eq.s32.totalorder %s24, 0
      %p93 = por %p91, %p92
      %s95 = sadd.s32 %s94, 1
      %p98 = scmp.eq.s32.totalorder %s18, 1
      %p99 = scmp.ne.s32.totalorder %s94, %s96
      %p100 = scmp.eq.s32.totalorder %s18, 0
      %p101 = por %p99, %p100
      %p102 = scmp.ne.s32.totalorder %s94, %s96
      %p103 = scmp.eq.s32.totalorder %s23, 1
      %p104 = por %p102, %p103
      %p105 = scmp.ne.s32.totalorder %s96, %s97
      %p106 = scmp.eq.s32.totalorder %s23, 0
      %p107 = por %p105, %p106
      %p108 = scmp.ne.s32.totalorder %s96, %s97
      %p109 = scmp.eq.s32.totalorder %s24, 1
      %p110 = por %p108, %p109
      %p112 = scmp.ne.s32.totalorder %s97, %s111
      %p113 = scmp.eq.s32.totalorder %s24, 0
      %p114 = por %p112, %p113
      %s116 = sadd.s32 %s115, 1
      %p119 = scmp.eq.s32.totalorder %s18, 1
      %p120 = scmp.ne.s32.totalorder %s115, %s117
      %p121 = scmp.eq.s32.totalorder %s18, 0
      %p122 = por %p120, %p121
      %p123 = scmp.ne.s32.totalorder %s115, %s117
      %p124 = scmp.eq.s32.totalorder %s23, 1
      %p125 = por %p123, %p124
      %p126 = scmp.ne.s32.totalorder %s117, %s118
      %p127 = scmp.eq.s32.totalorder %s23, 0
      %p128 = por %p126, %p127
      %p129 = scmp.ne.s32.totalorder %s117, %s118
      %p130 = scmp.eq.s32.totalorder %s24, 1
      %p131 = por %p129, %p130
      %p133 = scmp.ne.s32.totalorder %s118, %s132
      %p134 = scmp.eq.s32.totalorder %s24, 0
      %p135 = por %p133, %p134
      %s136 = ssub.s32 %s18, %s25
      %p137 = scmp.eq.s32.totalorder %s136, 0
      %s139 = sadd.s32 %s138, 1
      %s140 = scalar_select %p137, %s138, %s139
      %p143 = pneg %p137
      %p144 = scmp.eq.s32.totalorder %s18, 1
      %p145 = por %p143, %p144
      %p146 = scmp.ne.s32.totalorder %s138, %s141
      %p147 = scmp.eq.s32.totalorder %s18, 0
      %p148 = por %p146, %p147
      %p149 = scmp.ne.s32.totalorder %s138, %s141
      %p150 = scmp.eq.s32.totalorder %s23, 1
      %p151 = por %p149, %p150
      %p152 = scmp.ne.s32.totalorder %s141, %s142
      %p153 = scmp.eq.s32.totalorder %s23, 0
      %p154 = por %p152, %p153
      %p155 = scmp.ne.s32.totalorder %s141, %s142
      %p156 = scmp.eq.s32.totalorder %s24, 1
      %p157 = por %p155, %p156
      %p159 = scmp.ne.s32.totalorder %s142, %s158
      %p160 = scmp.eq.s32.totalorder %s24, 0
      %p161 = por %p159, %p160
      %p162 = scmp.le.s32.totalorder 1, %s18
      %p163 = scmp.lt.s32.totalorder %s18, 3
      %p164 = pnand %p162, %p163
      %p165 = pneg %p164
      // Predicated region
      $region9: #{tpu_custom_call.1} parent=5 // pred_check
        _
      $region10: #{tpu_custom_call.1} parent=5 // pred_check_branch
        %167 = sbr.rel (%p164) target = $region12
      $region11: #{tpu_custom_call.1} parent=5 // pred_region
        %s168 = ssub.s32 %s18, 1
        // Predicated region
        $region13: #{tpu_custom_call.1} parent=11 // pred_check
          %p169 = pneg %p65
        $region14: #{tpu_custom_call.1} parent=11 // pred_check_branch
          %171 = sbr.rel (%p169) target = $region16
        $region15: #{tpu_custom_call.1} parent=11 // pred_region
          %s173 = ssub.s32 1024, 1024
          %174 = vsyncadd [#allocation6], %s173
          %s175 = sshll.u32 [#allocation5], 4
          %s176 = int_to_ptr.vmem [resolvable:$true] %s175
          %181 = dma.hbm_to_vmem [thread:$0]  %s1, 1024, %s176, [#allocation6], 64, 64, 4
        $region16: #{tpu_custom_call.1} parent=11 // pred_fallthru
          _
        // Predicated region
        $region17: #{tpu_custom_call.1} parent=11 // pred_check
          %p182 = pneg %p86
        $region18: #{tpu_custom_call.1} parent=11 // pred_check_branch
          %184 = sbr.rel (%p182) target = $region20
        $region19: #{tpu_custom_call.1} parent=11 // pred_region
          _
        $region20: #{tpu_custom_call.1} parent=11 // pred_fallthru
          _
        // Predicated region
        $region21: #{tpu_custom_call.1} parent=11 // pred_check
          %p185 = pneg %p107
        $region22: #{tpu_custom_call.1} parent=11 // pred_check_branch
          %187 = sbr.rel (%p185) target = $region24
        $region23: #{tpu_custom_call.1} parent=11 // pred_region
          %s189 = ssub.s32 1024, 1024
          %190 = vsyncadd [#allocation6], %s189
          %s191 = sshll.u32 [#allocation7], 4
          %s192 = int_to_ptr.vmem [resolvable:$true] %s191
          %197 = dma.hbm_to_vmem [thread:$0]  %s3, 1024, %s192, [#allocation6], 64, 64, 4
        $region24: #{tpu_custom_call.1} parent=11 // pred_fallthru
          _
        // Predicated region
        $region25: #{tpu_custom_call.1} parent=11 // pred_check
          %p198 = pneg %p128
        $region26: #{tpu_custom_call.1} parent=11 // pred_check_branch
          %200 = sbr.rel (%p198) target = $region28
        $region27: #{tpu_custom_call.1} parent=11 // pred_region
          _
        $region28: #{tpu_custom_call.1} parent=11 // pred_fallthru
          _
      $region12: #{tpu_custom_call.1} parent=5 // pred_fallthru
        _
      %p201 = scmp.lt.s32.totalorder %s18, 2
      // Predicated region
      $region29: #{tpu_custom_call.1} parent=5 // pred_check
        %p202 = pneg %p201
      $region30: #{tpu_custom_call.1} parent=5 // pred_check_branch
        %204 = sbr.rel (%p202) target = $region32
      $region31: #{tpu_custom_call.1} parent=5 // pred_region
        // Predicated region
        $region33: #{tpu_custom_call.1} parent=31 // pred_check
          %p205 = pneg %p38
        $region34: #{tpu_custom_call.1} parent=31 // pred_check_branch
          %207 = sbr.rel (%p205) target = $region36
        $region35: #{tpu_custom_call.1} parent=31 // pred_region
          %s208 = sand.u32 %s28, 1
          %s209 = scalar_lea.sflag [#allocation3], %s208
          %s210 = sand.u32 %s28, 1
          %s211 = smul.addr %s210, 8
          %s212 = scalar_lea.vmem [#allocation2], %s211
          %s214 = ssub.s32 128, 128
          %215 = vsyncadd %s209, %s214
          %s216 = smul.addr %s18, 128
          %s217 = scalar_lea.hbm %s0, %s216
          %s219 = sshll.u32 %s212, 4
          %s220 = int_to_ptr.vmem [resolvable:$true] %s219
          %222 = dma.hbm_to_vmem [thread:$0]  %s217, 128, %s220, %s209
        $region36: #{tpu_custom_call.1} parent=31 // pred_fallthru
          _
      $region32: #{tpu_custom_call.1} parent=5 // pred_fallthru
        _
      %p223 = scmp.le.s32.totalorder 1, %s18
      %p224 = scmp.lt.s32.totalorder %s18, 3
      %p225 = pnand %p223, %p224
      %p226 = pneg %p225
      // Predicated region
      $region37: #{tpu_custom_call.1} parent=5 // pred_check
        _
      $region38: #{tpu_custom_call.1} parent=5 // pred_check_branch
        %228 = sbr.rel (%p225) target = $region40
      $region39: #{tpu_custom_call.1} parent=5 // pred_region
        %s229 = ssub.s32 %s18, 1
        %s230 = sand.u32 %s31, 1
        %s231 = scalar_lea.sflag [#allocation3], %s230
        %s232 = sand.u32 %s31, 1
        %s233 = smul.addr %s232, 8
        %s234 = scalar_lea.vmem [#allocation2], %s233
        // Predicated region
        $region41: #{tpu_custom_call.1} parent=39 // pred_check
          %p235 = pneg %p44
        $region42: #{tpu_custom_call.1} parent=39 // pred_check_branch
          %237 = sbr.rel (%p235) target = $region44
        $region43: #{tpu_custom_call.1} parent=39 // pred_region
          %238 = dma.done %s231, 128
        $region44: #{tpu_custom_call.1} parent=39 // pred_fallthru
          _
        // Predicated region
        $region45: #{tpu_custom_call.1} parent=39 // pred_check
          %p239 = pneg %p65
        $region46: #{tpu_custom_call.1} parent=39 // pred_check_branch
          %241 = sbr.rel (%p239) target = $region48
        $region47: #{tpu_custom_call.1} parent=39 // pred_region
          %242 = dma.done [#allocation6], 1024
        $region48: #{tpu_custom_call.1} parent=39 // pred_fallthru
          _
        // Predicated region
        $region49: #{tpu_custom_call.1} parent=39 // pred_check
          %p243 = pneg %p107
        $region50: #{tpu_custom_call.1} parent=39 // pred_check_branch
          %245 = sbr.rel (%p243) target = $region52
        $region51: #{tpu_custom_call.1} parent=39 // pred_region
          %246 = dma.done [#allocation6], 1024
        $region52: #{tpu_custom_call.1} parent=39 // pred_fallthru
          _
        %s247 = sand.u32 %s31, 1
        %s248 = scalar_lea.sflag [#allocation3], %s247
        %s249 = sand.u32 %s31, 1
        %s250 = smul.addr %s249, 8
        %s251 = scalar_lea.vmem [#allocation2], %s250
        %p252 = pneg %p44
        %p253 = pneg %p41
        %p254 = pneg %p65
        %p255 = pneg %p62
        %p256 = pneg %p86
        %p257 = pneg %p83
        %p258 = pneg %p107
        %p259 = pneg %p104
        %p260 = pneg %p128
        %p261 = pneg %p125
        %p262 = pneg %p154
        %p263 = pneg %p151
        %s264 = sand.u32 %s141, 1
        %s265 = scalar_lea.sflag [#allocation4], %s264
        %s266 = sand.u32 %s141, 1
        %s267 = smul.addr %s266, 4
        %s268 = scalar_lea.vmem [#allocation8], %s267
        %v270 = vld [vmem:[%s234] sm:$0xff]
        %v271 = vpack.c.bf16 %v270, %v270
        %v272 = vld [vmem:[#allocation5] sm:$0xf]
        %v273 = vld [vmem:[#allocation5 + $0x4] sm:$0xf]
        %v274 = vld [vmem:[#allocation5 + $0x8] sm:$0xf]
        %v275 = vld [vmem:[#allocation5 + $0xc] sm:$0xf]
        %v276 = vld [vmem:[#allocation5 + $0x10] sm:$0xf]
        %v277 = vld [vmem:[#allocation5 + $0x14] sm:$0xf]
        %v278 = vld [vmem:[#allocation5 + $0x18] sm:$0xf]
        %v279 = vld [vmem:[#allocation5 + $0x1c] sm:$0xf]
        %v280 = vld [vmem:[#allocation5 + $0x20] sm:$0xf]
        %v281 = vld [vmem:[#allocation5 + $0x24] sm:$0xf]
        %v282 = vld [vmem:[#allocation5 + $0x28] sm:$0xf]
        %v283 = vld [vmem:[#allocation5 + $0x2c] sm:$0xf]
        %v284 = vld [vmem:[#allocation5 + $0x30] sm:$0xf]
        %v285 = vld [vmem:[#allocation5 + $0x34] sm:$0xf]
        %v286 = vld [vmem:[#allocation5 + $0x38] sm:$0xf]
        %v287 = vld [vmem:[#allocation5 + $0x3c] sm:$0xf]
        %v288 = vld [vmem:[%s2] sm:$0x1]
        %v290 = vlaneseq
        %v291 = vshrl.u32 %v290, 7
        %v292 = vsub.s32 0, %v291
        %v293 = vrot.slane %v288, %v292
        %v311 = vunpack.c.l.b16 %v272
        %v312 = vunpack.c.l.b16 %v273
        %v313 = vunpack.c.l.b16 %v274
        %v314 = vunpack.c.l.b16 %v275
        %v315 = vunpack.c.l.b16 %v276
        %v316 = vunpack.c.l.b16 %v277
        %v317 = vunpack.c.l.b16 %v278
        %v318 = vunpack.c.l.b16 %v279
        %v319 = vunpack.c.l.b16 %v280
        %v320 = vunpack.c.l.b16 %v281
        %v321 = vunpack.c.l.b16 %v282
        %v322 = vunpack.c.l.b16 %v283
        %v323 = vunpack.c.l.b16 %v284
        %v324 = vunpack.c.l.b16 %v285
        %v325 = vunpack.c.l.b16 %v286
        %v326 = vunpack.c.l.b16 %v287
        %v327 = vpack.c.b16 %v312, %v311
        %v328 = vpack.c.b16 %v314, %v313
        %v329 = vpack.c.b16 %v316, %v315
        %v330 = vpack.c.b16 %v318, %v317
        %v331 = vpack.c.b16 %v320, %v319
        %v332 = vpack.c.b16 %v322, %v321
        %v333 = vpack.c.b16 %v324, %v323
        %v334 = vpack.c.b16 %v326, %v325
        %343 = vmatprep.subr.bf16.mxu0 0
        %344 = vmatpush1.bf16.msra.mxu0 %v334
        %345 = vmatprep.subr.bf16.mxu0 0
        %346 = vmatpush1.bf16.msra.mxu0 %v333
        %347 = vmatprep.subr.bf16.mxu0 0
        %348 = vmatpush1.bf16.msra.mxu0 %v332
        %349 = vmatprep.subr.bf16.mxu0 0
        %350 = vmatpush1.bf16.msra.mxu0 %v331
        %351 = vmatprep.subr.bf16.mxu0 0
        %352 = vmatpush1.bf16.msra.mxu0 %v330
        %353 = vmatprep.subr.bf16.mxu0 0
        %354 = vmatpush1.bf16.msra.mxu0 %v329
        %355 = vmatprep.subr.bf16.mxu0 0
        %356 = vmatpush1.bf16.msra.mxu0 %v328
        %357 = vmatprep.subr.bf16.mxu0 0
        %358 = vmatpush1.bf16.msra.mxu0 %v327
        %359 = vmatprep.subr.bf16.mxu0 0
        %360 = vmatpush2.bf16.msra.mxu0 0
        %361 = vmatprep.subr.bf16.mxu0 0
        %362 = vmatpush2.bf16.msra.mxu0 0
        %363 = vmatprep.subr.bf16.mxu0 0
        %364 = vmatpush2.bf16.msra.mxu0 0
        %365 = vmatprep.subr.bf16.mxu0 0
        %366 = vmatpush2.bf16.msra.mxu0 0
        %367 = vmatprep.subr.bf16.mxu0 0
        %368 = vmatpush2.bf16.msra.mxu0 0
        %369 = vmatprep.subr.bf16.mxu0 0
        %370 = vmatpush2.bf16.msra.mxu0 0
        %371 = vmatprep.subr.bf16.mxu0 0
        %372 = vmatpush2.bf16.msra.mxu0 0
        %373 = vmatprep.subr.bf16.mxu0 0
        %374 = vmatpush2.bf16.msra.mxu0 0
        %375 = vmatprep.mubr.bf16.mxu0 0
        %376 = vmatmul.mubr.bf16.gmra.mxu0 %v271
        %v377 = vpop.f32.mrf.mxu0
        %v378 = vadd.f32 %v293, %v377
        %v379 = vpop.f32.mrf.mxu0
        %v380 = vpop.f32.mrf.mxu0
        %v381 = vpop.f32.mrf.mxu0
        %382 = vdwg.mxu0
        %v383 = vmax.f32 %v378, 0.0
        %v384 = vpack.c.bf16 %v383, %v383
        %v385 = vld [vmem:[#allocation7] sm:$0xf]
        %v386 = vld [vmem:[#allocation7 + $0x4] sm:$0xf]
        %v387 = vld [vmem:[#allocation7 + $0x8] sm:$0xf]
        %v388 = vld [vmem:[#allocation7 + $0xc] sm:$0xf]
        %v389 = vld [vmem:[#allocation7 + $0x10] sm:$0xf]
        %v390 = vld [vmem:[#allocation7 + $0x14] sm:$0xf]
        %v391 = vld [vmem:[#allocation7 + $0x18] sm:$0xf]
        %v392 = vld [vmem:[#allocation7 + $0x1c] sm:$0xf]
        %v393 = vld [vmem:[#allocation7 + $0x20] sm:$0xf]
        %v394 = vld [vmem:[#allocation7 + $0x24] sm:$0xf]
        %v395 = vld [vmem:[#allocation7 + $0x28] sm:$0xf]
        %v396 = vld [vmem:[#allocation7 + $0x2c] sm:$0xf]
        %v397 = vld [vmem:[#allocation7 + $0x30] sm:$0xf]
        %v398 = vld [vmem:[#allocation7 + $0x34] sm:$0xf]
        %v399 = vld [vmem:[#allocation7 + $0x38] sm:$0xf]
        %v400 = vld [vmem:[#allocation7 + $0x3c] sm:$0xf]
        %v401 = vld [vmem:[%s4] sm:$0x1]
        %v403 = vlaneseq
        %v404 = vshrl.u32 %v403, 7
        %v405 = vsub.s32 0, %v404
        %v406 = vrot.slane %v401, %v405
        %v424 = vunpack.c.l.b16 %v385
        %v425 = vunpack.c.l.b16 %v386
        %v426 = vunpack.c.l.b16 %v387
        %v427 = vunpack.c.l.b16 %v388
        %v428 = vunpack.c.l.b16 %v389
        %v429 = vunpack.c.l.b16 %v390
        %v430 = vunpack.c.l.b16 %v391
        %v431 = vunpack.c.l.b16 %v392
        %v432 = vunpack.c.l.b16 %v393
        %v433 = vunpack.c.l.b16 %v394
        %v434 = vunpack.c.l.b16 %v395
        %v435 = vunpack.c.l.b16 %v396
        %v436 = vunpack.c.l.b16 %v397
        %v437 = vunpack.c.l.b16 %v398
        %v438 = vunpack.c.l.b16 %v399
        %v439 = vunpack.c.l.b16 %v400
        %v440 = vpack.c.b16 %v425, %v424
        %v441 = vpack.c.b16 %v427, %v426
        %v442 = vpack.c.b16 %v429, %v428
        %v443 = vpack.c.b16 %v431, %v430
        %v444 = vpack.c.b16 %v433, %v432
        %v445 = vpack.c.b16 %v435, %v434
        %v446 = vpack.c.b16 %v437, %v436
        %v447 = vpack.c.b16 %v439, %v438
        %456 = vmatprep.subr.bf16.mxu0 0
        %457 = vmatpush1.bf16.msra.mxu0 %v447
        %458 = vmatprep.subr.bf16.mxu0 0
        %459 = vmatpush1.bf16.msra.mxu0 %v446
        %460 = vmatprep.subr.bf16.mxu0 0
        %461 = vmatpush1.bf16.msra.mxu0 %v445
        %462 = vmatprep.subr.bf16.mxu0 0
        %463 = vmatpush1.bf16.msra.mxu0 %v444
        %464 = vmatprep.subr.bf16.mxu0 0
        %465 = vmatpush1.bf16.msra.mxu0 %v443
        %466 = vmatprep.subr.bf16.mxu0 0
        %467 = vmatpush1.bf16.msra.mxu0 %v442
        %468 = vmatprep.subr.bf16.mxu0 0
        %469 = vmatpush1.bf16.msra.mxu0 %v441
        %470 = vmatprep.subr.bf16.mxu0 0
        %471 = vmatpush1.bf16.msra.mxu0 %v440
        %472 = vmatprep.subr.bf16.mxu0 0
        %473 = vmatpush2.bf16.msra.mxu0 0
        %474 = vmatprep.subr.bf16.mxu0 0
        %475 = vmatpush2.bf16.msra.mxu0 0
        %476 = vmatprep.subr.bf16.mxu0 0
        %477 = vmatpush2.bf16.msra.mxu0 0
        %478 = vmatprep.subr.bf16.mxu0 0
        %479 = vmatpush2.bf16.msra.mxu0 0
        %480 = vmatprep.subr.bf16.mxu0 0
        %481 = vmatpush2.bf16.msra.mxu0 0
        %482 = vmatprep.subr.bf16.mxu0 0
        %483 = vmatpush2.bf16.msra.mxu0 0
        %484 = vmatprep.subr.bf16.mxu0 0
        %485 = vmatpush2.bf16.msra.mxu0 0
        %486 = vmatprep.subr.bf16.mxu0 0
        %487 = vmatpush2.bf16.msra.mxu0 0
        %488 = vmatprep.mubr.bf16.mxu0 0
        %489 = vmatmul.mubr.bf16.gmra.mxu0 %v384
        %v490 = vpop.f32.mrf.mxu0
        %v491 = vadd.f32 %v406, %v490
        %v492 = vpop.f32.mrf.mxu0
        %v493 = vpop.f32.mrf.mxu0
        %v494 = vpop.f32.mrf.mxu0
        %495 = vdwg.mxu0
        %v496 = vmax.f32 %v491, 0.0
        %v497 = vpack.c.bf16 %v496, %v496
        %498 = vst [vmem:[%s268] sm:$0xf] %v497
        %s499 = sand.u32 %s141, 1
        %s500 = scalar_lea.sflag [#allocation4], %s499
        %s501 = sand.u32 %s141, 1
        %s502 = smul.addr %s501, 4
        %s503 = scalar_lea.vmem [#allocation8], %s502
        // Predicated region
        $region53: #{tpu_custom_call.1} parent=39 // pred_check
          %p504 = pneg %p151
        $region54: #{tpu_custom_call.1} parent=39 // pred_check_branch
          %506 = sbr.rel (%p504) target = $region56
        $region55: #{tpu_custom_call.1} parent=39 // pred_region
          %s508 = ssub.s32 64, 64
          %509 = vsyncadd %s500, %s508
          %s510 = smul.addr %s23, 64
          %s511 = scalar_lea.hbm %s5, %s510
          %s513 = sshll.u32 %s503, 4
          %s514 = int_to_ptr.vmem [resolvable:$true] %s513
          %516 = dma.vmem_to_hbm [thread:$0]  %s514, 64, %s511, %s500
        $region56: #{tpu_custom_call.1} parent=39 // pred_fallthru
          _
      $region40: #{tpu_custom_call.1} parent=5 // pred_fallthru
        _
      %p517 = scmp.le.s32.totalorder 2, %s18
      // Predicated region
      $region57: #{tpu_custom_call.1} parent=5 // pred_check
        %p518 = pneg %p517
      $region58: #{tpu_custom_call.1} parent=5 // pred_check_branch
        %520 = sbr.rel (%p518) target = $region60
      $region59: #{tpu_custom_call.1} parent=5 // pred_region
        %s521 = ssub.s32 %s18, 2
        // Predicated region
        $region61: #{tpu_custom_call.1} parent=59 // pred_check
          %p522 = pneg %p157
        $region62: #{tpu_custom_call.1} parent=59 // pred_check_branch
          %524 = sbr.rel (%p522) target = $region64
        $region63: #{tpu_custom_call.1} parent=59 // pred_region
          %s525 = sand.u32 %s142, 1
          %s526 = scalar_lea.sflag [#allocation4], %s525
          %s527 = sand.u32 %s142, 1
          %s528 = smul.addr %s527, 4
          %s529 = scalar_lea.vmem [#allocation8], %s528
          %530 = dma.done %s526, 64
        $region64: #{tpu_custom_call.1} parent=59 // pred_fallthru
          _
      $region60: #{tpu_custom_call.1} parent=5 // pred_fallthru
        _
    $region6: #{tpu_custom_call.1} parent=1 // loop_footer
      %s22 = sadd.s32 1, %s18
    $region7: #{tpu_custom_call.1} parent=1 // loop_footer_branch
      %17 = sbr.rel target = $region3
    $region8: #{tpu_custom_call.1} parent=1 // loop_exit
      _
    %531 = vsyncpa [#allocation3], 1
    %s532 = scalar_lea.sflag [#allocation3], 1
    %533 = vsyncpa %s532, 1
    %534 = vsyncpa [#allocation6], 1
    %535 = vsyncpa [#allocation4], 1
    %s536 = scalar_lea.sflag [#allocation4], 1
    %537 = vsyncpa %s536, 1

// kernel: tpu_custom_call.1
$region0: #{tpu_custom_call.1}
  #allocation0 [shape = 'u32[]', space=smem, size = 0x4, offset = 0x4, fixed_abs, tag = 'smem constant byte address 0x4 - core index']
  #allocation1 [shape = 'u32[144,128]{1,0:T(1,128)}', space=vmem, size = 0x12000, scoped, tag = 'internal scratch']
  %s0 = inlined_call_operand.hbm [shape: f32[16,128], index: 0, kind: input, shape index: {}]
  %s1 = inlined_call_operand.hbm [shape: bf16[128,128], index: 1, kind: input, shape index: {}]
  %s2 = inlined_call_operand.vmem [shape: f32[1,128], index: 2, kind: input, shape index: {}]
  %s3 = inlined_call_operand.hbm [shape: bf16[128,128], index: 3, kind: input, shape index: {}]
  %s4 = inlined_call_operand.vmem [shape: f32[1,128], index: 4, kind: input, shape index: {}]
  %s5 = inlined_call_operand.hbm [shape: bf16[16,128], index: 5, kind: output, shape index: {}]
  %s6 = sld [smem:[#allocation0]]
  $region65: #{tpu_custom_call.1} parent=0
    _
  %s8 = ssub.s32 1, %s6
  %s9 = scalar_select 0, %s8, %s6
  $region1: #{tpu_custom_call.1} parent=0
    #allocation2 [shape = 'u8[8192]{0}', space=vmem, size = 0x2000, scoped, tag = 'input window, operand 0']
    #allocation3 [shape = 's32[2]{0}', space=sflag, size = 0x8, scoped, tag = 'scoped memory for tpu_custom_call.1']
    #allocation4 [shape = 's32[2]{0}', space=sflag, size = 0x8, scoped, tag = 'scoped memory for tpu_custom_call.1']
    #allocation5 [shape = 'u8[32768]{0}', space=vmem, size = 0x8000, scoped, tag = 'input window, operand 1, single buffered']
    #allocation6 [shape = 's32[1]{0}', space=sflag, size = 0x4, scoped, tag = 'scoped memory for tpu_custom_call.1']
    #allocation7 [shape = 'u8[32768]{0}', space=vmem, size = 0x8000, scoped, tag = 'input window, operand 3, single buffered']
    #allocation8 [shape = 'u8[4096]{0}', space=vmem, size = 0x1000, scoped, tag = 'output window, operand 0']
    %10 = vsyncpa [#allocation3], 0
    %s11 = scalar_lea.sflag [#allocation3], 1
    %12 = vsyncpa %s11, 0
    %13 = vsyncpa [#allocation6], 0
    %14 = vsyncpa [#allocation4], 0
    %s15 = scalar_lea.sflag [#allocation4], 1
    %16 = vsyncpa %s15, 0
    loop: start=0, step=1, limit=4
    $region2: #{tpu_custom_call.1} parent=1 // loop_pre_header
      _
    $region3: #{tpu_custom_call.1} parent=1 // loop_header
      %s18 = sphi 0, %s22
      %p19 = scmp.ge.s32.totalorder %s18, 4
      %s28 = sphi 0, %s30
      %s31 = sphi 0, %s28
      %s32 = sphi 0, %s31
      %s48 = sphi 0, %s32
      %s52 = sphi 0, %s52
      %s54 = sphi 0, %s52
      %s55 = sphi 0, %s54
      %s69 = sphi 0, %s55
      %s73 = sphi 0, %s73
      %s75 = sphi 0, %s73
      %s76 = sphi 0, %s75
      %s90 = sphi 0, %s76
      %s94 = sphi 0, %s94
      %s96 = sphi 0, %s94
      %s97 = sphi 0, %s96
      %s111 = sphi 0, %s97
      %s115 = sphi 0, %s115
      %s117 = sphi 0, %s115
      %s118 = sphi 0, %s117
      %s132 = sphi 0, %s118
      %s138 = sphi 0, %s140
      %s141 = sphi 0, %s138
      %s142 = sphi 0, %s141
      %s158 = sphi 0, %s142
    $region4: #{tpu_custom_call.1} parent=1 // loop_header_branch
      %21 = sbr.rel (%p19) target = $region8
    $region5: #{tpu_custom_call.1} parent=1 // loop_body
      %s23 = ssub.s32 %s18, 1
      %s24 = ssub.s32 %s18, 2
      %s25 = sadd.s32 %s18, 1
      %s26 = ssub.s32 %s18, %s25
      %p27 = scmp.eq.s32.totalorder %s26, 0
      %s29 = sadd.s32 %s28, 1
      %s30 = scalar_select %p27, %s28, %s29
      %p33 = pneg %p27
      %p34 = scmp.eq.s32.totalorder %s18, 1
      %p35 = por %p33, %p34
      %p36 = scmp.ne.s32.totalorder %s28, %s31
      %p37 = scmp.eq.s32.totalorder %s18, 0
      %p38 = por %p36, %p37
      %p39 = scmp.ne.s32.totalorder %s28, %s31
      %p40 = scmp.eq.s32.totalorder %s23, 1
      %p41 = por %p39, %p40
      %p42 = scmp.ne.s32.totalorder %s31, %s32
      %p43 = scmp.eq.s32.totalorder %s23, 0
      %p44 = por %p42, %p43
      %p45 = scmp.ne.s32.totalorder %s31, %s32
      %p46 = scmp.eq.s32.totalorder %s24, 1
      %p47 = por %p45, %p46
      %p49 = scmp.ne.s32.totalorder %s32, %s48
      %p50 = scmp.eq.s32.totalorder %s24, 0
      %p51 = por %p49, %p50
      %s53 = sadd.s32 %s52, 1
      %p56 = scmp.eq.s32.totalorder %s18, 1
      %p57 = scmp.ne.s32.totalorder %s52, %s54
      %p58 = scmp.eq.s32.totalorder %s18, 0
      %p59 = por %p57, %p58
      %p60 = scmp.ne.s32.totalorder %s52, %s54
      %p61 = scmp.eq.s32.totalorder %s23, 1
      %p62 = por %p60, %p61
      %p63 = scmp.ne.s32.totalorder %s54, %s55
      %p64 = scmp.eq.s32.totalorder %s23, 0
      %p65 = por %p63, %p64
      %p66 = scmp.ne.s32.totalorder %s54, %s55
      %p67 = scmp.eq.s32.totalorder %s24, 1
      %p68 = por %p66, %p67
      %p70 = scmp.ne.s32.totalorder %s55, %s69
      %p71 = scmp.eq.s32.totalorder %s24, 0
      %p72 = por %p70, %p71
      %s74 = sadd.s32 %s73, 1
      %p77 = scmp.eq.s32.totalorder %s18, 1
      %p78 = scmp.ne.s32.totalorder %s73, %s75
      %p79 = scmp.eq.s32.totalorder %s18, 0
      %p80 = por %p78, %p79
      %p81 = scmp.ne.s32.totalorder %s73, %s75
      %p82 = scmp.eq.s32.totalorder %s23, 1
      %p83 = por %p81, %p82
      %p84 = scmp.ne.s32.totalorder %s75, %s76
      %p85 = scmp.eq.s32.totalorder %s23, 0
      %p86 = por %p84, %p85
      %p87 = scmp.ne.s32.totalorder %s75, %s76
      %p88 = scmp.eq.s32.totalorder %s24, 1
      %p89 = por %p87, %p88
      %p91 = scmp.ne.s32.totalorder %s76, %s90
      %p92 = scmp.eq.s32.totalorder %s24, 0
      %p93 = por %p91, %p92
      %s95 = sadd.s32 %s94, 1
      %p98 = scmp.eq.s32.totalorder %s18, 1
      %p99 = scmp.ne.s32.totalorder %s94, %s96
      %p100 = scmp.eq.s32.totalorder %s18, 0
      %p101 = por %p99, %p100
      %p102 = scmp.ne.s32.totalorder %s94, %s96
      %p103 = scmp.eq.s32.totalorder %s23, 1
      %p104 = por %p102, %p103
      %p105 = scmp.ne.s32.totalorder %s96, %s97
      %p106 = scmp.eq.s32.totalorder %s23, 0
      %p107 = por %p105, %p106
      %p108 = scmp.ne.s32.totalorder %s96, %s97
      %p109 = scmp.eq.s32.totalorder %s24, 1
      %p110 = por %p108, %p109
      %p112 = scmp.ne.s32.totalorder %s97, %s111
      %p113 = scmp.eq.s32.totalorder %s24, 0
      %p114 = por %p112, %p113
      %s116 = sadd.s32 %s115, 1
      %p119 = scmp.eq.s32.totalorder %s18, 1
      %p120 = scmp.ne.s32.totalorder %s115, %s117
      %p121 = scmp.eq.s32.totalorder %s18, 0
      %p122 = por %p120, %p121
      %p123 = scmp.ne.s32.totalorder %s115, %s117
      %p124 = scmp.eq.s32.totalorder %s23, 1
      %p125 = por %p123, %p124
      %p126 = scmp.ne.s32.totalorder %s117, %s118
      %p127 = scmp.eq.s32.totalorder %s23, 0
      %p128 = por %p126, %p127
      %p129 = scmp.ne.s32.totalorder %s117, %s118
      %p130 = scmp.eq.s32.totalorder %s24, 1
      %p131 = por %p129, %p130
      %p133 = scmp.ne.s32.totalorder %s118, %s132
      %p134 = scmp.eq.s32.totalorder %s24, 0
      %p135 = por %p133, %p134
      %s136 = ssub.s32 %s18, %s25
      %p137 = scmp.eq.s32.totalorder %s136, 0
      %s139 = sadd.s32 %s138, 1
      %s140 = scalar_select %p137, %s138, %s139
      %p143 = pneg %p137
      %p144 = scmp.eq.s32.totalorder %s18, 1
      %p145 = por %p143, %p144
      %p146 = scmp.ne.s32.totalorder %s138, %s141
      %p147 = scmp.eq.s32.totalorder %s18, 0
      %p148 = por %p146, %p147
      %p149 = scmp.ne.s32.totalorder %s138, %s141
      %p150 = scmp.eq.s32.totalorder %s23, 1
      %p151 = por %p149, %p150
      %p152 = scmp.ne.s32.totalorder %s141, %s142
      %p153 = scmp.eq.s32.totalorder %s23, 0
      %p154 = por %p152, %p153
      %p155 = scmp.ne.s32.totalorder %s141, %s142
      %p156 = scmp.eq.s32.totalorder %s24, 1
      %p157 = por %p155, %p156
      %p159 = scmp.ne.s32.totalorder %s142, %s158
      %p160 = scmp.eq.s32.totalorder %s24, 0
      %p161 = por %p159, %p160
      %p162 = scmp.le.s32.totalorder 1, %s18
      %p163 = scmp.lt.s32.totalorder %s18, 3
      %p164 = pnand %p162, %p163
      %p165 = pneg %p164
      // Predicated region
      $region9: #{tpu_custom_call.1} parent=5 // pred_check
        _
      $region10: #{tpu_custom_call.1} parent=5 // pred_check_branch
        %167 = sbr.rel (%p164) target = $region12
      $region11: #{tpu_custom_call.1} parent=5 // pred_region
        %s168 = ssub.s32 %s18, 1
        // Predicated region
        $region13: #{tpu_custom_call.1} parent=11 // pred_check
          %p169 = pneg %p65
        $region14: #{tpu_custom_call.1} parent=11 // pred_check_branch
          %171 = sbr.rel (%p169) target = $region16
        $region15: #{tpu_custom_call.1} parent=11 // pred_region
          %s173 = ssub.s32 1024, 1024
          %174 = vsyncadd [#allocation6], %s173
          %s175 = sshll.u32 [#allocation5], 4
          %s176 = int_to_ptr.vmem [resolvable:$true] %s175
          %181 = dma.hbm_to_vmem [thread:$0]  %s1, 1024, %s176, [#allocation6], 64, 64, 4
        $region16: #{tpu_custom_call.1} parent=11 // pred_fallthru
          _
        // Predicated region
        $region17: #{tpu_custom_call.1} parent=11 // pred_check
          %p182 = pneg %p86
        $region18: #{tpu_custom_call.1} parent=11 // pred_check_branch
          %184 = sbr.rel (%p182) target = $region20
        $region19: #{tpu_custom_call.1} parent=11 // pred_region
          _
        $region20: #{tpu_custom_call.1} parent=11 // pred_fallthru
          _
        // Predicated region
        $region21: #{tpu_custom_call.1} parent=11 // pred_check
          %p185 = pneg %p107
        $region22: #{tpu_custom_call.1} parent=11 // pred_check_branch
          %187 = sbr.rel (%p185) target = $region24
        $region23: #{tpu_custom_call.1} parent=11 // pred_region
          %s189 = ssub.s32 1024, 1024
          %190 = vsyncadd [#allocation6], %s189
          %s191 = sshll.u32 [#allocation7], 4
          %s192 = int_to_ptr.vmem [resolvable:$true] %s191
          %197 = dma.hbm_to_vmem [thread:$0]  %s3, 1024, %s192, [#allocation6], 64, 64, 4
        $region24: #{tpu_custom_call.1} parent=11 // pred_fallthru
          _
        // Predicated region
        $region25: #{tpu_custom_call.1} parent=11 // pred_check
          %p198 = pneg %p128
        $region26: #{tpu_custom_call.1} parent=11 // pred_check_branch
          %200 = sbr.rel (%p198) target = $region28
        $region27: #{tpu_custom_call.1} parent=11 // pred_region
          _
        $region28: #{tpu_custom_call.1} parent=11 // pred_fallthru
          _
      $region12: #{tpu_custom_call.1} parent=5 // pred_fallthru
        _
      %p201 = scmp.lt.s32.totalorder %s18, 2
      // Predicated region
      $region29: #{tpu_custom_call.1} parent=5 // pred_check
        %p202 = pneg %p201
      $region30: #{tpu_custom_call.1} parent=5 // pred_check_branch
        %204 = sbr.rel (%p202) target = $region32
      $region31: #{tpu_custom_call.1} parent=5 // pred_region
        // Predicated region
        $region33: #{tpu_custom_call.1} parent=31 // pred_check
          %p205 = pneg %p38
        $region34: #{tpu_custom_call.1} parent=31 // pred_check_branch
          %207 = sbr.rel (%p205) target = $region36
        $region35: #{tpu_custom_call.1} parent=31 // pred_region
          %s208 = sand.u32 %s28, 1
          %s209 = scalar_lea.sflag [#allocation3], %s208
          %s210 = sand.u32 %s28, 1
          %s211 = smul.addr %s210, 8
          %s212 = scalar_lea.vmem [#allocation2], %s211
          %s214 = ssub.s32 128, 128
          %215 = vsyncadd %s209, %s214
          %s216 = smul.addr %s18, 128
          %s217 = scalar_lea.hbm %s0, %s216
          %s219 = sshll.u32 %s212, 4
          %s220 = int_to_ptr.vmem [resolvable:$true] %s219
          %222 = dma.hbm_to_vmem [thread:$0]  %s217, 128, %s220, %s209
        $region36: #{tpu_custom_call.1} parent=31 // pred_fallthru
          _
      $region32: #{tpu_custom_call.1} parent=5 // pred_fallthru
        _
      %p223 = scmp.le.s32.totalorder 1, %s18
      %p224 = scmp.lt.s32.totalorder %s18, 3
      %p225 = pnand %p223, %p224
      %p226 = pneg %p225
      // Predicated region
      $region37: #{tpu_custom_call.1} parent=5 // pred_check
        _
      $region38: #{tpu_custom_call.1} parent=5 // pred_check_branch
        %228 = sbr.rel (%p225) target = $region40
      $region39: #{tpu_custom_call.1} parent=5 // pred_region
        %s229 = ssub.s32 %s18, 1
        %s230 = sand.u32 %s31, 1
        %s231 = scalar_lea.sflag [#allocation3], %s230
        %s232 = sand.u32 %s31, 1
        %s233 = smul.addr %s232, 8
        %s234 = scalar_lea.vmem [#allocation2], %s233
        // Predicated region
        $region41: #{tpu_custom_call.1} parent=39 // pred_check
          %p235 = pneg %p44
        $region42: #{tpu_custom_call.1} parent=39 // pred_check_branch
          %237 = sbr.rel (%p235) target = $region44
        $region43: #{tpu_custom_call.1} parent=39 // pred_region
          %238 = dma.done %s231, 128
        $region44: #{tpu_custom_call.1} parent=39 // pred_fallthru
          _
        // Predicated region
        $region45: #{tpu_custom_call.1} parent=39 // pred_check
          %p239 = pneg %p65
        $region46: #{tpu_custom_call.1} parent=39 // pred_check_branch
          %241 = sbr.rel (%p239) target = $region48
        $region47: #{tpu_custom_call.1} parent=39 // pred_region
          %242 = dma.done [#allocation6], 1024
        $region48: #{tpu_custom_call.1} parent=39 // pred_fallthru
          _
        // Predicated region
        $region49: #{tpu_custom_call.1} parent=39 // pred_check
          %p243 = pneg %p107
        $region50: #{tpu_custom_call.1} parent=39 // pred_check_branch
          %245 = sbr.rel (%p243) target = $region52
        $region51: #{tpu_custom_call.1} parent=39 // pred_region
          %246 = dma.done [#allocation6], 1024
        $region52: #{tpu_custom_call.1} parent=39 // pred_fallthru
          _
        %s247 = sand.u32 %s31, 1
        %s248 = scalar_lea.sflag [#allocation3], %s247
        %s249 = sand.u32 %s31, 1
        %s250 = smul.addr %s249, 8
        %s251 = scalar_lea.vmem [#allocation2], %s250
        %p252 = pneg %p44
        %p253 = pneg %p41
        %p254 = pneg %p65
        %p255 = pneg %p62
        %p256 = pneg %p86
        %p257 = pneg %p83
        %p258 = pneg %p107
        %p259 = pneg %p104
        %p260 = pneg %p128
        %p261 = pneg %p125
        %p262 = pneg %p154
        %p263 = pneg %p151
        %s264 = sand.u32 %s141, 1
        %s265 = scalar_lea.sflag [#allocation4], %s264
        %s266 = sand.u32 %s141, 1
        %s267 = smul.addr %s266, 4
        %s268 = scalar_lea.vmem [#allocation8], %s267
        %v270 = vld [vmem:[%s234] sm:$0xff]
        %v271 = vpack.c.bf16 %v270, %v270
        %v272 = vld [vmem:[#allocation5] sm:$0xf]
        %v273 = vld [vmem:[#allocation5 + $0x4] sm:$0xf]
        %v274 = vld [vmem:[#allocation5 + $0x8] sm:$0xf]
        %v275 = vld [vmem:[#allocation5 + $0xc] sm:$0xf]
        %v276 = vld [vmem:[#allocation5 + $0x10] sm:$0xf]
        %v277 = vld [vmem:[#allocation5 + $0x14] sm:$0xf]
        %v278 = vld [vmem:[#allocation5 + $0x18] sm:$0xf]
        %v279 = vld [vmem:[#allocation5 + $0x1c] sm:$0xf]
        %v280 = vld [vmem:[#allocation5 + $0x20] sm:$0xf]
        %v281 = vld [vmem:[#allocation5 + $0x24] sm:$0xf]
        %v282 = vld [vmem:[#allocation5 + $0x28] sm:$0xf]
        %v283 = vld [vmem:[#allocation5 + $0x2c] sm:$0xf]
        %v284 = vld [vmem:[#allocation5 + $0x30] sm:$0xf]
        %v285 = vld [vmem:[#allocation5 + $0x34] sm:$0xf]
        %v286 = vld [vmem:[#allocation5 + $0x38] sm:$0xf]
        %v287 = vld [vmem:[#allocation5 + $0x3c] sm:$0xf]
        %v288 = vld [vmem:[%s2] sm:$0x1]
        %v290 = vlaneseq
        %v291 = vshrl.u32 %v290, 7
        %v292 = vsub.s32 0, %v291
        %v293 = vrot.slane %v288, %v292
        %v311 = vunpack.c.l.b16 %v272
        %v312 = vunpack.c.l.b16 %v273
        %v313 = vunpack.c.l.b16 %v274
        %v314 = vunpack.c.l.b16 %v275
        %v315 = vunpack.c.l.b16 %v276
        %v316 = vunpack.c.l.b16 %v277
        %v317 = vunpack.c.l.b16 %v278
        %v318 = vunpack.c.l.b16 %v279
        %v319 = vunpack.c.l.b16 %v280
        %v320 = vunpack.c.l.b16 %v281
        %v321 = vunpack.c.l.b16 %v282
        %v322 = vunpack.c.l.b16 %v283
        %v323 = vunpack.c.l.b16 %v284
        %v324 = vunpack.c.l.b16 %v285
        %v325 = vunpack.c.l.b16 %v286
        %v326 = vunpack.c.l.b16 %v287
        %v327 = vpack.c.b16 %v312, %v311
        %v328 = vpack.c.b16 %v314, %v313
        %v329 = vpack.c.b16 %v316, %v315
        %v330 = vpack.c.b16 %v318, %v317
        %v331 = vpack.c.b16 %v320, %v319
        %v332 = vpack.c.b16 %v322, %v321
        %v333 = vpack.c.b16 %v324, %v323
        %v334 = vpack.c.b16 %v326, %v325
        %343 = vmatprep.subr.bf16.mxu0 0
        %344 = vmatpush1.bf16.msra.mxu0 %v334
        %345 = vmatprep.subr.bf16.mxu0 0
        %346 = vmatpush1.bf16.msra.mxu0 %v333
        %347 = vmatprep.subr.bf16.mxu0 0
        %348 = vmatpush1.bf16.msra.mxu0 %v332
        %349 = vmatprep.subr.bf16.mxu0 0
        %350 = vmatpush1.bf16.msra.mxu0 %v331
        %351 = vmatprep.subr.bf16.mxu0 0
        %352 = vmatpush1.bf16.msra.mxu0 %v330
        %353 = vmatprep.subr.bf16.mxu0 0
        %354 = vmatpush1.bf16.msra.mxu0 %v329
        %355 = vmatprep.subr.bf16.mxu0 0
        %356 = vmatpush1.bf16.msra.mxu0 %v328
        %357 = vmatprep.subr.bf16.mxu0 0
        %358 = vmatpush1.bf16.msra.mxu0 %v327
        %359 = vmatprep.subr.bf16.mxu0 0
        %360 = vmatpush2.bf16.msra.mxu0 0
        %361 = vmatprep.subr.bf16.mxu0 0
        %362 = vmatpush2.bf16.msra.mxu0 0
        %363 = vmatprep.subr.bf16.mxu0 0
        %364 = vmatpush2.bf16.msra.mxu0 0
        %365 = vmatprep.subr.bf16.mxu0 0
        %366 = vmatpush2.bf16.msra.mxu0 0
        %367 = vmatprep.subr.bf16.mxu0 0
        %368 = vmatpush2.bf16.msra.mxu0 0
        %369 = vmatprep.subr.bf16.mxu0 0
        %370 = vmatpush2.bf16.msra.mxu0 0
        %371 = vmatprep.subr.bf16.mxu0 0
        %372 = vmatpush2.bf16.msra.mxu0 0
        %373 = vmatprep.subr.bf16.mxu0 0
        %374 = vmatpush2.bf16.msra.mxu0 0
        %375 = vmatprep.mubr.bf16.mxu0 0
        %376 = vmatmul.mubr.bf16.gmra.mxu0 %v271
        %v377 = vpop.f32.mrf.mxu0
        %v378 = vadd.f32 %v293, %v377
        %v379 = vpop.f32.mrf.mxu0
        %v380 = vpop.f32.mrf.mxu0
        %v381 = vpop.f32.mrf.mxu0
        %382 = vdwg.mxu0
        %v383 = vmax.f32 %v378, 0.0
        %v384 = vpack.c.bf16 %v383, %v383
        %v385 = vld [vmem:[#allocation7] sm:$0xf]
        %v386 = vld [vmem:[#allocation7 + $0x4] sm:$0xf]
        %v387 = vld [vmem:[#allocation7 + $0x8] sm:$0xf]
        %v388 = vld [vmem:[#allocation7 + $0xc] sm:$0xf]
        %v389 = vld [vmem:[#allocation7 + $0x10] sm:$0xf]
        %v390 = vld [vmem:[#allocation7 + $0x14] sm:$0xf]
        %v391 = vld [vmem:[#allocation7 + $0x18] sm:$0xf]
        %v392 = vld [vmem:[#allocation7 + $0x1c] sm:$0xf]
        %v393 = vld [vmem:[#allocation7 + $0x20] sm:$0xf]
        %v394 = vld [vmem:[#allocation7 + $0x24] sm:$0xf]
        %v395 = vld [vmem:[#allocation7 + $0x28] sm:$0xf]
        %v396 = vld [vmem:[#allocation7 + $0x2c] sm:$0xf]
        %v397 = vld [vmem:[#allocation7 + $0x30] sm:$0xf]
        %v398 = vld [vmem:[#allocation7 + $0x34] sm:$0xf]
        %v399 = vld [vmem:[#allocation7 + $0x38] sm:$0xf]
        %v400 = vld [vmem:[#allocation7 + $0x3c] sm:$0xf]
        %v401 = vld [vmem:[%s4] sm:$0x1]
        %v403 = vlaneseq
        %v404 = vshrl.u32 %v403, 7
        %v405 = vsub.s32 0, %v404
        %v406 = vrot.slane %v401, %v405
        %v424 = vunpack.c.l.b16 %v385
        %v425 = vunpack.c.l.b16 %v386
        %v426 = vunpack.c.l.b16 %v387
        %v427 = vunpack.c.l.b16 %v388
        %v428 = vunpack.c.l.b16 %v389
        %v429 = vunpack.c.l.b16 %v390
        %v430 = vunpack.c.l.b16 %v391
        %v431 = vunpack.c.l.b16 %v392
        %v432 = vunpack.c.l.b16 %v393
        %v433 = vunpack.c.l.b16 %v394
        %v434 = vunpack.c.l.b16 %v395
        %v435 = vunpack.c.l.b16 %v396
        %v436 = vunpack.c.l.b16 %v397
        %v437 = vunpack.c.l.b16 %v398
        %v438 = vunpack.c.l.b16 %v399
        %v439 = vunpack.c.l.b16 %v400
        %v440 = vpack.c.b16 %v425, %v424
        %v441 = vpack.c.b16 %v427, %v426
        %v442 = vpack.c.b16 %v429, %v428
        %v443 = vpack.c.b16 %v431, %v430
        %v444 = vpack.c.b16 %v433, %v432
        %v445 = vpack.c.b16 %v435, %v434
        %v446 = vpack.c.b16 %v437, %v436
        %v447 = vpack.c.b16 %v439, %v438
        %456 = vmatprep.subr.bf16.mxu0 0
        %457 = vmatpush1.bf16.msra.mxu0 %v447
        %458 = vmatprep.subr.bf16.mxu0 0
        %459 = vmatpush1.bf16.msra.mxu0 %v446
        %460 = vmatprep.subr.bf16.mxu0 0
        %461 = vmatpush1.bf16.msra.mxu0 %v445
        %462 = vmatprep.subr.bf16.mxu0 0
        %463 = vmatpush1.bf16.msra.mxu0 %v444
        %464 = vmatprep.subr.bf16.mxu0 0
        %465 = vmatpush1.bf16.msra.mxu0 %v443
        %466 = vmatprep.subr.bf16.mxu0 0
        %467 = vmatpush1.bf16.msra.mxu0 %v442
        %468 = vmatprep.subr.bf16.mxu0 0
        %469 = vmatpush1.bf16.msra.mxu0 %v441
        %470 = vmatprep.subr.bf16.mxu0 0
        %471 = vmatpush1.bf16.msra.mxu0 %v440
        %472 = vmatprep.subr.bf16.mxu0 0
        %473 = vmatpush2.bf16.msra.mxu0 0
        %474 = vmatprep.subr.bf16.mxu0 0
        %475 = vmatpush2.bf16.msra.mxu0 0
        %476 = vmatprep.subr.bf16.mxu0 0
        %477 = vmatpush2.bf16.msra.mxu0 0
        %478 = vmatprep.subr.bf16.mxu0 0
        %479 = vmatpush2.bf16.msra.mxu0 0
        %480 = vmatprep.subr.bf16.mxu0 0
        %481 = vmatpush2.bf16.msra.mxu0 0
        %482 = vmatprep.subr.bf16.mxu0 0
        %483 = vmatpush2.bf16.msra.mxu0 0
        %484 = vmatprep.subr.bf16.mxu0 0
        %485 = vmatpush2.bf16.msra.mxu0 0
        %486 = vmatprep.subr.bf16.mxu0 0
        %487 = vmatpush2.bf16.msra.mxu0 0
        %488 = vmatprep.mubr.bf16.mxu0 0
        %489 = vmatmul.mubr.bf16.gmra.mxu0 %v384
        %v490 = vpop.f32.mrf.mxu0
        %v491 = vadd.f32 %v406, %v490
        %v492 = vpop.f32.mrf.mxu0
        %v493 = vpop.f32.mrf.mxu0
        %v494 = vpop.f32.mrf.mxu0
        %495 = vdwg.mxu0
        %v496 = vmax.f32 %v491, 0.0
        %v497 = vpack.c.bf16 %v496, %v496
        %498 = vst [vmem:[%s268] sm:$0xf] %v497
        %s499 = sand.u32 %s141, 1
        %s500 = scalar_lea.sflag [#allocation4], %s499
        %s501 = sand.u32 %s141, 1
        %s502 = smul.addr %s501, 4
        %s503 = scalar_lea.vmem [#allocation8], %s502
        // Predicated region
        $region53: #{tpu_custom_call.1} parent=39 // pred_check
          %p504 = pneg %p151
        $region54: #{tpu_custom_call.1} parent=39 // pred_check_branch
          %506 = sbr.rel (%p504) target = $region56
        $region55: #{tpu_custom_call.1} parent=39 // pred_region
          %s508 = ssub.s32 64, 64
          %509 = vsyncadd %s500, %s508
          %s510 = smul.addr %s23, 64
          %s511 = scalar_lea.hbm %s5, %s510
          %s513 = sshll.u32 %s503, 4
          %s514 = int_to_ptr.vmem [resolvable:$true] %s513
          %516 = dma.vmem_to_hbm [thread:$0]  %s514, 64, %s511, %s500
        $region56: #{tpu_custom_call.1} parent=39 // pred_fallthru
          _
      $region40: #{tpu_custom_call.1} parent=5 // pred_fallthru
        _
      %p517 = scmp.le.s32.totalorder 2, %s18
      // Predicated region
      $region57: #{tpu_custom_call.1} parent=5 // pred_check
        %p518 = pneg %p517
      $region58: #{tpu_custom_call.1} parent=5 // pred_check_branch
        %520 = sbr.rel (%p518) target = $region60
      $region59: #{tpu_custom_call.1} parent=5 // pred_region
        %s521 = ssub.s32 %s18, 2
        // Predicated region
        $region61: #{tpu_custom_call.1} parent=59 // pred_check
          %p522 = pneg %p157
        $region62: #{tpu_custom_call.1} parent=59 // pred_check_branch
          %524 = sbr.rel (%p522) target = $region64
        $region63: #{tpu_custom_call.1} parent=59 // pred_region
          %s525 = sand.u32 %s142, 1
          %s526 = scalar_lea.sflag [#allocation4], %s525
          %s527 = sand.u32 %s142, 1
          %s528 = smul.addr %s527, 4
          %s529 = scalar_lea.vmem [#allocation8], %s528
          %530 = dma.done %s526, 64
        $region64: #{tpu_custom_call.1} parent=59 // pred_fallthru
          _
      $region60: #{tpu_custom_call.1} parent=5 // pred_fallthru
        _
    $region6: #{tpu_custom_call.1} parent=1 // loop_footer
      %s22 = sadd.s32 1, %s18
    $region7: #{tpu_custom_call.1} parent=1 // loop_footer_branch
      %17 = sbr.rel target = $region3
    $region8: #{tpu_custom_call.1} parent=1 // loop_exit
      _
    %531 = vsyncpa [#allocation3], 1
    %s532 = scalar_lea.sflag [#allocation3], 1
    %533 = vsyncpa %s532, 1
    %534 = vsyncpa [#allocation6], 1
    %535 = vsyncpa [#allocation4], 1
    %s536 = scalar_lea.sflag [#allocation4], 1
    %537 = vsyncpa %s536, 1

</llo_original>
